<compile_context>
chip_gen: v6e
topology: v6e:2x2x1
jax: 0.10.0
libtpu: 0.0.40
codegen_flags: <defaults>
</compile_context>

<pallas_src>
import functools

import jax
import jax.numpy as jnp
from jax import lax
from jax.experimental import pallas as pl
from jax.experimental.pallas import tpu as pltpu


def _round_up(x, m):
    return (x + m - 1) // m * m


def _pad2(x, rows, cols):
    return jnp.pad(x, ((0, rows - x.shape[0]), (0, cols - x.shape[1])))


# ----------------------------------------------------------------------------
# Fused kernel:
#   enc    = A @ relu(A @ X @ W1) @ W2        (bf16 MXU matmuls, f32 acc)
#   protos = (S_spt @ enc) / k_shot           (MXU selection matmul)
#   xq     = S_qry @ enc                      (MXU selection matmul)
#   out    = log_softmax(-||xq - protos||^2)  (Gram expansion on MXU)
# ----------------------------------------------------------------------------
def protonet_kernel(feat_ref, adj_ref, w1_ref, w2_ref, s_spt_ref, s_qry_ref,
                    out_ref, *, n_way, k_shot, f_pad, h_pad, d_pad):
    f32 = jnp.float32
    bf16 = jnp.bfloat16

    adj = adj_ref[...]                                        # (N, N) bf16

    # ---- layer 1: H = relu(A @ X @ W1); contract the smaller width vs A ----
    if h_pad <= f_pad:
        xw1 = jnp.dot(feat_ref[...], w1_ref[...], preferred_element_type=f32)
        h = jnp.dot(adj, xw1.astype(bf16), preferred_element_type=f32)
    else:
        ax = jnp.dot(adj, feat_ref[...], preferred_element_type=f32)
        h = jnp.dot(ax.astype(bf16), w1_ref[...], preferred_element_type=f32)
    h = jnp.maximum(h, 0.0).astype(bf16)                      # (N, H) bf16

    # ---- layer 2: enc = A @ H @ W2; same association rule -------------------
    if d_pad <= h_pad:
        hw2 = jnp.dot(h, w2_ref[...], preferred_element_type=f32)
        enc = jnp.dot(adj, hw2.astype(bf16), preferred_element_type=f32)
    else:
        ah = jnp.dot(adj, h, preferred_element_type=f32)
        enc = jnp.dot(ah.astype(bf16), w2_ref[...], preferred_element_type=f32)
    enc = enc.astype(bf16)                                    # (N, D) bf16

    # ---- MXU gather: prototypes (k-shot mean, exact f32 scale) & queries ----
    protos = jnp.dot(s_spt_ref[...], enc,
                     preferred_element_type=f32) * (1.0 / k_shot)  # (NCLS, D)
    xq = jnp.dot(s_qry_ref[...], enc, preferred_element_type=f32)  # (NQ, D)

    # ---- squared euclidean dist via ||x||^2 + ||p||^2 - 2 x.p^T -------------
    xq_sq = jnp.sum(xq * xq, axis=1, keepdims=True)               # (NQ, 1)
    ones_row = jnp.ones((1, protos.shape[1]), f32)
    p_sq = lax.dot_general(ones_row, protos * protos,             # (1, NCLS)
                           (((1,), (1,)), ((), ())),
                           preferred_element_type=f32)
    cross = lax.dot_general(xq, protos,                           # (NQ, NCLS)
                            (((1,), (1,)), ((), ())),
                            preferred_element_type=f32)
    # clamp at 0: documented deviation from the reference (rounding safety)
    dists = jnp.maximum(xq_sq + p_sq - 2.0 * cross, 0.0)

    # ---- log_softmax(-dists); padded classes masked out ---------------------
    logits = -dists
    col = lax.broadcasted_iota(jnp.int32, logits.shape, 1)
    logits = jnp.where(col < n_way, logits, -1e30)
    m = jnp.max(logits, axis=1, keepdims=True)
    lse = m + jnp.log(jnp.sum(jnp.exp(logits - m), axis=1, keepdims=True))
    out_ref[...] = (logits - lse).astype(out_ref.dtype)


# ----------------------------------------------------------------------------
# Wrapper: lane-dense padding, selection matrices, single fused pallas_call.
# ----------------------------------------------------------------------------
def protonet_forward(features, adj, w1, w2, id_spt, id_qry, label_new,
                     n_way, k_shot):
    n_nodes, f_in = features.shape
    d_hidden = w1.shape[1]
    d_latent = w2.shape[1]
    n_qry = id_qry.shape[0]

    # lane-dense / sublane-aligned padded shapes
    n_pad = _round_up(n_nodes, 128)
    f_pad = _round_up(f_in, 128)
    h_pad = _round_up(d_hidden, 128)
    d_pad = _round_up(d_latent, 128)
    nq_pad = _round_up(n_qry, 16)          # 16 sublanes: bf16-friendly rows
    ncls_pad = _round_up(n_way, 128)

    feat_p = _pad2(features, n_pad, f_pad).astype(jnp.bfloat16)
    adj_p = _pad2(adj, n_pad, n_pad).astype(jnp.bfloat16)
    w1_p = _pad2(w1, f_pad, h_pad).astype(jnp.bfloat16)
    w2_p = _pad2(w2, h_pad, d_pad).astype(jnp.bfloat16)

    # one-hot selection matrices (entries 0/1: exact in bf16; the 1/k_shot
    # mean scaling happens in f32 inside the kernel)
    s_spt = jax.nn.one_hot(id_spt, n_pad, dtype=jnp.float32)      # (n*k, N)
    s_spt = s_spt.reshape(n_way, k_shot, n_pad).sum(axis=1)       # (n, N)
    s_spt = jnp.pad(s_spt, ((0, ncls_pad - n_way), (0, 0))).astype(jnp.bfloat16)
    s_qry = jax.nn.one_hot(id_qry, n_pad, dtype=jnp.float32)      # (nq, N)
    s_qry = jnp.pad(s_qry, ((0, nq_pad - n_qry), (0, 0))).astype(jnp.bfloat16)

    kernel = functools.partial(protonet_kernel, n_way=n_way, k_shot=k_shot,
                               f_pad=f_pad, h_pad=h_pad, d_pad=d_pad)

    # VMEM budget derived from padded shapes (single-buffered inputs, bf16)
    bf16_in_bytes = 2 * (feat_p.size + adj_p.size + w1_p.size + w2_p.size
                         + s_spt.size + s_qry.size)
    interm_bytes = 4 * n_pad * max(f_pad, h_pad, d_pad) * 3   # H/enc/headroom
    out_bytes = 4 * nq_pad * ncls_pad
    vmem_limit = int((bf16_in_bytes + interm_bytes + out_bytes) * 1.5)
    vmem_limit = min(max(vmem_limit, 32 * 1024 * 1024), 100 * 1024 * 1024)

    vmem = pltpu.MemorySpace.VMEM
    out_padded = pl.pallas_call(
        kernel,
        out_shape=jax.ShapeDtypeStruct((nq_pad, ncls_pad), jnp.float32),
        in_specs=[pl.BlockSpec(memory_space=vmem)] * 6,   # whole arrays, no
        out_specs=pl.BlockSpec(memory_space=vmem),        # double-buffering
        compiler_params=pltpu.CompilerParams(vmem_limit_bytes=vmem_limit),
    )(feat_p, adj_p, w1_p, w2_p, s_spt, s_qry)

    output = out_padded[:n_qry, :n_way]        # real (nq, n_way) log-probs

    # glue: nll_loss + accuracy (the Adam step / backward is not a kernel)
    loss = -jnp.mean(output[jnp.arange(n_qry), label_new])
    preds = jnp.argmax(output, axis=1)
    acc = jnp.mean((preds == label_new).astype(jnp.float32))
    return output, loss, acc


if __name__ == "__main__":
    key = jax.random.PRNGKey(0)
    k_feat, k_adj, k_w1, k_w2 = jax.random.split(key, 4)

    # small synthetic problem
    n_nodes, f_in, d_hidden, d_latent = 64, 32, 32, 32
    n_way, k_shot, q_query = 4, 2, 3

    # features
    features = jax.random.normal(k_feat, (n_nodes, f_in), dtype=jnp.float32)

    # random symmetric adjacency with self-loops, row-normalized
    a = (jax.random.uniform(k_adj, (n_nodes, n_nodes)) < 0.1).astype(jnp.float32)
    a = jnp.maximum(a, a.T) + jnp.eye(n_nodes, dtype=jnp.float32)
    adj = a / jnp.sum(a, axis=1, keepdims=True)

    # deterministic encoder weights
    w1 = 0.1 * jax.random.normal(k_w1, (f_in, d_hidden), dtype=jnp.float32)
    w2 = 0.1 * jax.random.normal(k_w2, (d_hidden, d_latent), dtype=jnp.float32)

    # synthetic node classes: node i has class i % n_way
    # support: first k_shot nodes of each class; query: next q_query nodes
    id_spt, y_spt = [], []
    id_qry, y_qry = [], []
    for c in range(n_way):
        class_nodes = [i for i in range(n_nodes) if i % n_way == c]
        id_spt += class_nodes[:k_shot]
        y_spt += [c] * k_shot
        id_qry += class_nodes[k_shot:k_shot + q_query]
        y_qry += [c] * q_query

    # label_new: index of each query label in the compressed support-label list
    # (mirrors the PyTorch host-side .tolist().index() logic)
    if k_shot == 1:
        compressed = y_spt
    else:
        compressed = [int(sum(y_spt[i * k_shot:(i + 1) * k_shot]) / k_shot)
                      for i in range(n_way)]
    label_new_host = [compressed.index(y) for y in y_qry]

    id_spt = jnp.asarray(id_spt, dtype=jnp.int32)
    id_qry = jnp.asarray(id_qry, dtype=jnp.int32)
    label_new = jnp.asarray(label_new_host, dtype=jnp.int32)

    output, loss, acc = protonet_forward(
        features, adj, w1, w2, id_spt, id_qry, label_new, n_way, k_shot)
    jax.block_until_ready((output, loss, acc))

    assert output.shape == (n_way * q_query, n_way)
    # rows of log_softmax must exponentiate-sum to 1
    assert bool(jnp.allclose(jnp.sum(jnp.exp(output), axis=1), 1.0, atol=1e-3))
    assert bool(jnp.isfinite(loss))

    print("KERNEL_OK")
</pallas_src>

<mosaic_0001>
module attributes {stable_mosaic.version = 11 : i64} {
  func.func @protonet_kernel(%arg0: memref<128x128xbf16, #tpu.memory_space<vmem>>, %arg1: memref<128x128xbf16, #tpu.memory_space<vmem>>, %arg2: memref<128x128xbf16, #tpu.memory_space<vmem>>, %arg3: memref<128x128xbf16, #tpu.memory_space<vmem>>, %arg4: memref<128x128xbf16, #tpu.memory_space<vmem>>, %arg5: memref<16x128xbf16, #tpu.memory_space<vmem>>, %arg6: memref<16x128xf32, #tpu.memory_space<vmem>>) attributes {dimension_semantics = [], scalar_prefetch = 0 : i64, scratch_operands = 0 : i64, tpu.core_type = #tpu.core_type<tc>} {
    %c0 = arith.constant 0 : index
    %c0_0 = arith.constant 0 : index
    %0 = vector.load %arg1[%c0, %c0_0] : memref<128x128xbf16, #tpu.memory_space<vmem>>, vector<128x128xbf16>
    %c0_1 = arith.constant 0 : index
    %c0_2 = arith.constant 0 : index
    %1 = vector.load %arg0[%c0_1, %c0_2] : memref<128x128xbf16, #tpu.memory_space<vmem>>, vector<128x128xbf16>
    %c0_3 = arith.constant 0 : index
    %c0_4 = arith.constant 0 : index
    %2 = vector.load %arg2[%c0_3, %c0_4] : memref<128x128xbf16, #tpu.memory_space<vmem>>, vector<128x128xbf16>
    %cst = arith.constant dense<0.000000e+00> : vector<128x128xf32>
    %3 = tpu.matmul %1, %2, %cst {dimension_numbers = #tpu.dot_dimension_numbers<[1], [0], [0], [1], [0, 0, 1, 1], [], []>} : vector<128x128xbf16>, vector<128x128xbf16>, vector<128x128xf32> -> vector<128x128xf32>
    %4 = arith.truncf %3 : vector<128x128xf32> to vector<128x128xbf16>
    %cst_5 = arith.constant dense<0.000000e+00> : vector<128x128xf32>
    %5 = tpu.matmul %0, %4, %cst_5 {dimension_numbers = #tpu.dot_dimension_numbers<[1], [0], [0], [1], [0, 0, 1, 1], [], []>} : vector<128x128xbf16>, vector<128x128xbf16>, vector<128x128xf32> -> vector<128x128xf32>
    %cst_6 = arith.constant 0.000000e+00 : f32
    %6 = vector.broadcast %cst_6 : f32 to vector<128x128xf32>
    %7 = arith.maximumf %5, %6 : vector<128x128xf32>
    %8 = arith.truncf %7 : vector<128x128xf32> to vector<128x128xbf16>
    %c0_7 = arith.constant 0 : index
    %c0_8 = arith.constant 0 : index
    %9 = vector.load %arg3[%c0_7, %c0_8] : memref<128x128xbf16, #tpu.memory_space<vmem>>, vector<128x128xbf16>
    %cst_9 = arith.constant dense<0.000000e+00> : vector<128x128xf32>
    %10 = tpu.matmul %8, %9, %cst_9 {dimension_numbers = #tpu.dot_dimension_numbers<[1], [0], [0], [1], [0, 0, 1, 1], [], []>} : vector<128x128xbf16>, vector<128x128xbf16>, vector<128x128xf32> -> vector<128x128xf32>
    %11 = arith.truncf %10 : vector<128x128xf32> to vector<128x128xbf16>
    %cst_10 = arith.constant dense<0.000000e+00> : vector<128x128xf32>
    %12 = tpu.matmul %0, %11, %cst_10 {dimension_numbers = #tpu.dot_dimension_numbers<[1], [0], [0], [1], [0, 0, 1, 1], [], []>} : vector<128x128xbf16>, vector<128x128xbf16>, vector<128x128xf32> -> vector<128x128xf32>
    %13 = arith.truncf %12 : vector<128x128xf32> to vector<128x128xbf16>
    %c0_11 = arith.constant 0 : index
    %c0_12 = arith.constant 0 : index
    %14 = vector.load %arg4[%c0_11, %c0_12] : memref<128x128xbf16, #tpu.memory_space<vmem>>, vector<128x128xbf16>
    %cst_13 = arith.constant dense<0.000000e+00> : vector<128x128xf32>
    %15 = tpu.matmul %14, %13, %cst_13 {dimension_numbers = #tpu.dot_dimension_numbers<[1], [0], [0], [1], [0, 0, 1, 1], [], []>} : vector<128x128xbf16>, vector<128x128xbf16>, vector<128x128xf32> -> vector<128x128xf32>
    %cst_14 = arith.constant 5.000000e-01 : f32
    %16 = vector.broadcast %cst_14 : f32 to vector<128x128xf32>
    %17 = arith.mulf %15, %16 : vector<128x128xf32>
    %c0_15 = arith.constant 0 : index
    %c0_16 = arith.constant 0 : index
    %18 = vector.load %arg5[%c0_15, %c0_16] : memref<16x128xbf16, #tpu.memory_space<vmem>>, vector<16x128xbf16>
    %cst_17 = arith.constant dense<0.000000e+00> : vector<16x128xf32>
    %19 = tpu.matmul %18, %13, %cst_17 {dimension_numbers = #tpu.dot_dimension_numbers<[1], [0], [0], [1], [0, 0, 1, 1], [], []>} : vector<16x128xbf16>, vector<128x128xbf16>, vector<16x128xf32> -> vector<16x128xf32>
    %20 = arith.mulf %19, %19 : vector<16x128xf32>
    %cst_18 = arith.constant dense<0.000000e+00> : vector<16xf32>
    %21 = vector.multi_reduction <add>, %20, %cst_18 [1] : vector<16x128xf32> to vector<16xf32>
    %22 = vector.shape_cast %21 : vector<16xf32> to vector<16x1xf32>
    %cst_19 = arith.constant 1.000000e+00 : f32
    %23 = vector.broadcast %cst_19 : f32 to vector<1x128xf32>
    %24 = arith.mulf %17, %17 : vector<128x128xf32>
    %cst_20 = arith.constant dense<0.000000e+00> : vector<1x128xf32>
    %25 = tpu.matmul %23, %24, %cst_20 {dimension_numbers = #tpu.dot_dimension_numbers<[1], [1], [0], [0], [0, 0, 1, 0], [], []>} : vector<1x128xf32>, vector<128x128xf32>, vector<1x128xf32> -> vector<1x128xf32>
    %cst_21 = arith.constant dense<0.000000e+00> : vector<16x128xf32>
    %26 = tpu.matmul %19, %17, %cst_21 {dimension_numbers = #tpu.dot_dimension_numbers<[1], [1], [0], [0], [0, 0, 1, 0], [], []>} : vector<16x128xf32>, vector<128x128xf32>, vector<16x128xf32> -> vector<16x128xf32>
    %27 = vector.broadcast %22 : vector<16x1xf32> to vector<16x128xf32>
    %28 = vector.broadcast %25 : vector<1x128xf32> to vector<16x128xf32>
    %29 = arith.addf %27, %28 : vector<16x128xf32>
    %cst_22 = arith.constant 2.000000e+00 : f32
    %30 = vector.broadcast %cst_22 : f32 to vector<16x128xf32>
    %31 = arith.mulf %30, %26 : vector<16x128xf32>
    %32 = arith.subf %29, %31 : vector<16x128xf32>
    %cst_23 = arith.constant 0.000000e+00 : f32
    %33 = vector.broadcast %cst_23 : f32 to vector<16x128xf32>
    %34 = arith.maximumf %32, %33 : vector<16x128xf32>
    %cst_24 = arith.constant 0.000000e+00 : f32
    %35 = vector.broadcast %cst_24 : f32 to vector<16x128xf32>
    %36 = arith.subf %35, %34 : vector<16x128xf32>
    %37 = tpu.iota {dimensions = array<i32: 1>} : vector<16x128xi32>
    %c4_i32 = arith.constant 4 : i32
    %38 = vector.broadcast %c4_i32 : i32 to vector<16x128xi32>
    %39 = arith.cmpi slt, %37, %38 : vector<16x128xi32>
    %cst_25 = arith.constant -1.000000e+30 : f32
    %40 = vector.broadcast %cst_25 : f32 to vector<16x128xf32>
    %41 = arith.select %39, %36, %40 : vector<16x128xi1>, vector<16x128xf32>
    %cst_26 = arith.constant dense<0xFF800000> : vector<16xf32>
    %42 = vector.multi_reduction <maximumf>, %41, %cst_26 [1] : vector<16x128xf32> to vector<16xf32>
    %43 = vector.shape_cast %42 : vector<16xf32> to vector<16x1xf32>
    %44 = vector.broadcast %43 : vector<16x1xf32> to vector<16x128xf32>
    %45 = arith.subf %41, %44 : vector<16x128xf32>
    %46 = math.exp %45 : vector<16x128xf32>
    %cst_27 = arith.constant dense<0.000000e+00> : vector<16xf32>
    %47 = vector.multi_reduction <add>, %46, %cst_27 [1] : vector<16x128xf32> to vector<16xf32>
    %48 = vector.shape_cast %47 : vector<16xf32> to vector<16x1xf32>
    %49 = math.log %48 : vector<16x1xf32>
    %50 = arith.addf %43, %49 : vector<16x1xf32>
    %51 = vector.broadcast %50 : vector<16x1xf32> to vector<16x128xf32>
    %52 = arith.subf %41, %51 : vector<16x128xf32>
    %c0_28 = arith.constant 0 : index
    %c0_29 = arith.constant 0 : index
    %53 = vector.load %arg6[%c0_28, %c0_29] : memref<16x128xf32, #tpu.memory_space<vmem>>, vector<16x128xf32>
    tpu.vector_store %arg6[%c0_28, %c0_29], %52 {strides = array<i32>} : memref<16x128xf32, #tpu.memory_space<vmem>>, vector<16x128xf32>,
    return
  }
}

</mosaic_0001>

<llo_original>
// kernel: tpu_custom_call.1
$region0: #{tpu_custom_call.1}
  #allocation0 [shape = 'u32[]', space=smem, size = 0x4, offset = 0x4, fixed_abs, tag = 'smem constant byte address 0x4 - core index']
  #allocation1 [shape = 'u32[144,128]{1,0:T(1,128)}', space=vmem, size = 0x12000, scoped, tag = 'internal scratch']
  %s0 = inlined_call_operand.hbm [shape: bf16[128,128], index: 0, kind: input, shape index: {}]
  %s1 = inlined_call_operand.hbm [shape: bf16[128,128], index: 1, kind: input, shape index: {}]
  %s2 = inlined_call_operand.hbm [shape: bf16[128,128], index: 2, kind: input, shape index: {}]
  %s3 = inlined_call_operand.hbm [shape: bf16[128,128], index: 3, kind: input, shape index: {}]
  %s4 = inlined_call_operand.hbm [shape: bf16[128,128], index: 4, kind: input, shape index: {}]
  %s5 = inlined_call_operand.vmem [shape: bf16[16,128], index: 5, kind: input, shape index: {}]
  %s6 = inlined_call_operand.hbm [shape: f32[16,128], index: 6, kind: output, shape index: {}]
  %s7 = sld [smem:[#allocation0]]
  $region54: #{tpu_custom_call.1} parent=0
    _
  %s9 = ssub.s32 1, %s7
  %s10 = scalar_select 0, %s9, %s7
  $region1: #{tpu_custom_call.1} parent=0
    #allocation2 [shape = 'u8[32768]{0}', space=vmem, size = 0x8000, scoped, tag = 'input window, operand 0, single buffered']
    #allocation3 [shape = 's32[1]{0}', space=sflag, size = 0x4, scoped, tag = 'scoped memory for tpu_custom_call.1']
    #allocation4 [shape = 's32[1]{0}', space=sflag, size = 0x4, scoped, tag = 'scoped memory for tpu_custom_call.1']
    #allocation5 [shape = 'u8[32768]{0}', space=vmem, size = 0x8000, scoped, tag = 'input window, operand 1, single buffered']
    #allocation6 [shape = 's32[1]{0}', space=sflag, size = 0x4, scoped, tag = 'scoped memory for tpu_custom_call.1']
    #allocation7 [shape = 'u8[32768]{0}', space=vmem, size = 0x8000, scoped, tag = 'input window, operand 2, single buffered']
    #allocation8 [shape = 'u8[32768]{0}', space=vmem, size = 0x8000, scoped, tag = 'input window, operand 3, single buffered']
    #allocation9 [shape = 's32[1]{0}', space=sflag, size = 0x4, scoped, tag = 'scoped memory for tpu_custom_call.1']
    #allocation10 [shape = 'u8[32768]{0}', space=vmem, size = 0x8000, scoped, tag = 'input window, operand 4, single buffered']
    #allocation11 [shape = 'u8[8192]{0}', space=vmem, size = 0x2000, scoped, tag = 'output window, operand 0, single buffered']
    %11 = vsyncpa [#allocation3], 0
    %12 = vsyncpa [#allocation6], 0
    %13 = vsyncpa [#allocation9], 0
    %14 = vsyncpa [#allocation4], 0
    // Predicated region
    $region2: #{tpu_custom_call.1} parent=1 // pred_check
      _
    $region3: #{tpu_custom_call.1} parent=1 // pred_check_branch
      %16 = sbr.rel (0) target = $region5
    $region4: #{tpu_custom_call.1} parent=1 // pred_region
      %s18 = ssub.s32 1024, 1024
      %19 = vsyncadd [#allocation3], %s18
      %s20 = sshll.u32 [#allocation2], 4
      %s21 = int_to_ptr.vmem [resolvable:$true] %s20
      %26 = dma.hbm_to_vmem [thread:$0]  %s0, 1024, %s21, [#allocation3], 64, 64, 4
    $region5: #{tpu_custom_call.1} parent=1 // pred_fallthru
      _
    // Predicated region
    $region6: #{tpu_custom_call.1} parent=1 // pred_check
      _
    $region7: #{tpu_custom_call.1} parent=1 // pred_check_branch
      %28 = sbr.rel (0) target = $region9
    $region8: #{tpu_custom_call.1} parent=1 // pred_region
      %s30 = ssub.s32 1024, 1024
      %31 = vsyncadd [#allocation6], %s30
      %s32 = sshll.u32 [#allocation5], 4
      %s33 = int_to_ptr.vmem [resolvable:$true] %s32
      %38 = dma.hbm_to_vmem [thread:$0]  %s1, 1024, %s33, [#allocation6], 64, 64, 4
    $region9: #{tpu_custom_call.1} parent=1 // pred_fallthru
      _
    // Predicated region
    $region10: #{tpu_custom_call.1} parent=1 // pred_check
      _
    $region11: #{tpu_custom_call.1} parent=1 // pred_check_branch
      %40 = sbr.rel (0) target = $region13
    $region12: #{tpu_custom_call.1} parent=1 // pred_region
      %s42 = ssub.s32 1024, 1024
      %43 = vsyncadd [#allocation6], %s42
      %s44 = sshll.u32 [#allocation7], 4
      %s45 = int_to_ptr.vmem [resolvable:$true] %s44
      %50 = dma.hbm_to_vmem [thread:$0]  %s2, 1024, %s45, [#allocation6], 64, 64, 4
    $region13: #{tpu_custom_call.1} parent=1 // pred_fallthru
      _
    // Predicated region
    $region14: #{tpu_custom_call.1} parent=1 // pred_check
      _
    $region15: #{tpu_custom_call.1} parent=1 // pred_check_branch
      %52 = sbr.rel (0) target = $region17
    $region16: #{tpu_custom_call.1} parent=1 // pred_region
      %s54 = ssub.s32 1024, 1024
      %55 = vsyncadd [#allocation9], %s54
      %s56 = sshll.u32 [#allocation8], 4
      %s57 = int_to_ptr.vmem [resolvable:$true] %s56
      %62 = dma.hbm_to_vmem [thread:$0]  %s3, 1024, %s57, [#allocation9], 64, 64, 4
    $region17: #{tpu_custom_call.1} parent=1 // pred_fallthru
      _
    // Predicated region
    $region18: #{tpu_custom_call.1} parent=1 // pred_check
      _
    $region19: #{tpu_custom_call.1} parent=1 // pred_check_branch
      %64 = sbr.rel (0) target = $region21
    $region20: #{tpu_custom_call.1} parent=1 // pred_region
      %s66 = ssub.s32 1024, 1024
      %67 = vsyncadd [#allocation9], %s66
      %s68 = sshll.u32 [#allocation10], 4
      %s69 = int_to_ptr.vmem [resolvable:$true] %s68
      %74 = dma.hbm_to_vmem [thread:$0]  %s4, 1024, %s69, [#allocation9], 64, 64, 4
    $region21: #{tpu_custom_call.1} parent=1 // pred_fallthru
      _
    // Predicated region
    $region22: #{tpu_custom_call.1} parent=1 // pred_check
      _
    $region23: #{tpu_custom_call.1} parent=1 // pred_check_branch
      %76 = sbr.rel (0) target = $region25
    $region24: #{tpu_custom_call.1} parent=1 // pred_region
      _
    $region25: #{tpu_custom_call.1} parent=1 // pred_fallthru
      _
    // Predicated region
    $region26: #{tpu_custom_call.1} parent=1 // pred_check
      _
    $region27: #{tpu_custom_call.1} parent=1 // pred_check_branch
      %78 = sbr.rel (0) target = $region29
    $region28: #{tpu_custom_call.1} parent=1 // pred_region
      %79 = dma.done [#allocation3], 1024
    $region29: #{tpu_custom_call.1} parent=1 // pred_fallthru
      _
    // Predicated region
    $region30: #{tpu_custom_call.1} parent=1 // pred_check
      _
    $region31: #{tpu_custom_call.1} parent=1 // pred_check_branch
      %81 = sbr.rel (0) target = $region33
    $region32: #{tpu_custom_call.1} parent=1 // pred_region
      %82 = dma.done [#allocation6], 1024
    $region33: #{tpu_custom_call.1} parent=1 // pred_fallthru
      _
    // Predicated region
    $region34: #{tpu_custom_call.1} parent=1 // pred_check
      _
    $region35: #{tpu_custom_call.1} parent=1 // pred_check_branch
      %84 = sbr.rel (0) target = $region37
    $region36: #{tpu_custom_call.1} parent=1 // pred_region
      %85 = dma.done [#allocation6], 1024
    $region37: #{tpu_custom_call.1} parent=1 // pred_fallthru
      _
    // Predicated region
    $region38: #{tpu_custom_call.1} parent=1 // pred_check
      _
    $region39: #{tpu_custom_call.1} parent=1 // pred_check_branch
      %87 = sbr.rel (0) target = $region41
    $region40: #{tpu_custom_call.1} parent=1 // pred_region
      %88 = dma.done [#allocation9], 1024
    $region41: #{tpu_custom_call.1} parent=1 // pred_fallthru
      _
    // Predicated region
    $region42: #{tpu_custom_call.1} parent=1 // pred_check
      _
    $region43: #{tpu_custom_call.1} parent=1 // pred_check_branch
      %90 = sbr.rel (0) target = $region45
    $region44: #{tpu_custom_call.1} parent=1 // pred_region
      %91 = dma.done [#allocation9], 1024
    $region45: #{tpu_custom_call.1} parent=1 // pred_fallthru
      _
    %v93 = vld [vmem:[#allocation5] sm:$0xf]
    %v94 = vld [vmem:[#allocation5 + $0x4] sm:$0xf]
    %v95 = vld [vmem:[#allocation5 + $0x8] sm:$0xf]
    %v96 = vld [vmem:[#allocation5 + $0xc] sm:$0xf]
    %v97 = vld [vmem:[#allocation5 + $0x10] sm:$0xf]
    %v98 = vld [vmem:[#allocation5 + $0x14] sm:$0xf]
    %v99 = vld [vmem:[#allocation5 + $0x18] sm:$0xf]
    %v100 = vld [vmem:[#allocation5 + $0x1c] sm:$0xf]
    %v101 = vld [vmem:[#allocation5 + $0x20] sm:$0xf]
    %v102 = vld [vmem:[#allocation5 + $0x24] sm:$0xf]
    %v103 = vld [vmem:[#allocation5 + $0x28] sm:$0xf]
    %v104 = vld [vmem:[#allocation5 + $0x2c] sm:$0xf]
    %v105 = vld [vmem:[#allocation5 + $0x30] sm:$0xf]
    %v106 = vld [vmem:[#allocation5 + $0x34] sm:$0xf]
    %v107 = vld [vmem:[#allocation5 + $0x38] sm:$0xf]
    %v108 = vld [vmem:[#allocation5 + $0x3c] sm:$0xf]
    %v109 = vld [vmem:[#allocation2] sm:$0xf]
    %v110 = vld [vmem:[#allocation2 + $0x4] sm:$0xf]
    %v111 = vld [vmem:[#allocation2 + $0x8] sm:$0xf]
    %v112 = vld [vmem:[#allocation2 + $0xc] sm:$0xf]
    %v113 = vld [vmem:[#allocation2 + $0x10] sm:$0xf]
    %v114 = vld [vmem:[#allocation2 + $0x14] sm:$0xf]
    %v115 = vld [vmem:[#allocation2 + $0x18] sm:$0xf]
    %v116 = vld [vmem:[#allocation2 + $0x1c] sm:$0xf]
    %v117 = vld [vmem:[#allocation2 + $0x20] sm:$0xf]
    %v118 = vld [vmem:[#allocation2 + $0x24] sm:$0xf]
    %v119 = vld [vmem:[#allocation2 + $0x28] sm:$0xf]
    %v120 = vld [vmem:[#allocation2 + $0x2c] sm:$0xf]
    %v121 = vld [vmem:[#allocation2 + $0x30] sm:$0xf]
    %v122 = vld [vmem:[#allocation2 + $0x34] sm:$0xf]
    %v123 = vld [vmem:[#allocation2 + $0x38] sm:$0xf]
    %v124 = vld [vmem:[#allocation2 + $0x3c] sm:$0xf]
    %v125 = vld [vmem:[#allocation7] sm:$0xf]
    %v126 = vld [vmem:[#allocation7 + $0x4] sm:$0xf]
    %v127 = vld [vmem:[#allocation7 + $0x8] sm:$0xf]
    %v128 = vld [vmem:[#allocation7 + $0xc] sm:$0xf]
    %v129 = vld [vmem:[#allocation7 + $0x10] sm:$0xf]
    %v130 = vld [vmem:[#allocation7 + $0x14] sm:$0xf]
    %v131 = vld [vmem:[#allocation7 + $0x18] sm:$0xf]
    %v132 = vld [vmem:[#allocation7 + $0x1c] sm:$0xf]
    %v133 = vld [vmem:[#allocation7 + $0x20] sm:$0xf]
    %v134 = vld [vmem:[#allocation7 + $0x24] sm:$0xf]
    %v135 = vld [vmem:[#allocation7 + $0x28] sm:$0xf]
    %v136 = vld [vmem:[#allocation7 + $0x2c] sm:$0xf]
    %v137 = vld [vmem:[#allocation7 + $0x30] sm:$0xf]
    %v138 = vld [vmem:[#allocation7 + $0x34] sm:$0xf]
    %v139 = vld [vmem:[#allocation7 + $0x38] sm:$0xf]
    %v140 = vld [vmem:[#allocation7 + $0x3c] sm:$0xf]
    %v157 = vunpack.c.l.b16 %v109
    %v158 = vunpack.c.l.b16 %v110
    %v159 = vunpack.c.l.b16 %v111
    %v160 = vunpack.c.l.b16 %v112
    %v161 = vunpack.c.l.b16 %v113
    %v162 = vunpack.c.l.b16 %v114
    %v163 = vunpack.c.l.b16 %v115
    %v164 = vunpack.c.l.b16 %v116
    %v165 = vunpack.c.l.b16 %v117
    %v166 = vunpack.c.l.b16 %v118
    %v167 = vunpack.c.l.b16 %v119
    %v168 = vunpack.c.l.b16 %v120
    %v169 = vunpack.c.l.b16 %v121
    %v170 = vunpack.c.l.b16 %v122
    %v171 = vunpack.c.l.b16 %v123
    %v172 = vunpack.c.l.b16 %v124
    %v173 = vpack.c.b16 %v158, %v157
    %v174 = vpack.c.b16 %v160, %v159
    %v175 = vpack.c.b16 %v162, %v161
    %v176 = vpack.c.b16 %v164, %v163
    %v177 = vpack.c.b16 %v166, %v165
    %v178 = vpack.c.b16 %v168, %v167
    %v179 = vpack.c.b16 %v170, %v169
    %v180 = vpack.c.b16 %v172, %v171
    %v205 = vunpack.c.l.b16 %v125
    %v206 = vunpack.c.l.b16 %v126
    %v207 = vunpack.c.l.b16 %v127
    %v208 = vunpack.c.l.b16 %v128
    %v209 = vunpack.c.l.b16 %v129
    %v210 = vunpack.c.l.b16 %v130
    %v211 = vunpack.c.l.b16 %v131
    %v212 = vunpack.c.l.b16 %v132
    %v213 = vunpack.c.l.b16 %v133
    %v214 = vunpack.c.l.b16 %v134
    %v215 = vunpack.c.l.b16 %v135
    %v216 = vunpack.c.l.b16 %v136
    %v217 = vunpack.c.l.b16 %v137
    %v218 = vunpack.c.l.b16 %v138
    %v219 = vunpack.c.l.b16 %v139
    %v220 = vunpack.c.l.b16 %v140
    %v221 = vpack.c.b16 %v206, %v205
    %v222 = vpack.c.b16 %v208, %v207
    %v223 = vpack.c.b16 %v210, %v209
    %v224 = vpack.c.b16 %v212, %v211
    %v225 = vpack.c.b16 %v214, %v213
    %v226 = vpack.c.b16 %v216, %v215
    %v227 = vpack.c.b16 %v218, %v217
    %v228 = vpack.c.b16 %v220, %v219
    %237 = vmatprep.subr.bf16.mxu0 0
    %238 = vmatpush1.bf16.msra.mxu0 %v228
    %239 = vmatprep.subr.bf16.mxu0 0
    %240 = vmatpush1.bf16.msra.mxu0 %v227
    %241 = vmatprep.subr.bf16.mxu0 0
    %242 = vmatpush1.bf16.msra.mxu0 %v226
    %243 = vmatprep.subr.bf16.mxu0 0
    %244 = vmatpush1.bf16.msra.mxu0 %v225
    %245 = vmatprep.subr.bf16.mxu0 0
    %246 = vmatpush1.bf16.msra.mxu0 %v224
    %247 = vmatprep.subr.bf16.mxu0 0
    %248 = vmatpush1.bf16.msra.mxu0 %v223
    %249 = vmatprep.subr.bf16.mxu0 0
    %250 = vmatpush1.bf16.msra.mxu0 %v222
    %251 = vmatprep.subr.bf16.mxu0 0
    %252 = vmatpush1.bf16.msra.mxu0 %v221
    %253 = vmatprep.subr.bf16.mxu0 0
    %254 = vmatpush2.bf16.msra.mxu0 0
    %255 = vmatprep.subr.bf16.mxu0 0
    %256 = vmatpush2.bf16.msra.mxu0 0
    %257 = vmatprep.subr.bf16.mxu0 0
    %258 = vmatpush2.bf16.msra.mxu0 0
    %259 = vmatprep.subr.bf16.mxu0 0
    %260 = vmatpush2.bf16.msra.mxu0 0
    %261 = vmatprep.subr.bf16.mxu0 0
    %262 = vmatpush2.bf16.msra.mxu0 0
    %263 = vmatprep.subr.bf16.mxu0 0
    %264 = vmatpush2.bf16.msra.mxu0 0
    %265 = vmatprep.subr.bf16.mxu0 0
    %266 = vmatpush2.bf16.msra.mxu0 0
    %267 = vmatprep.subr.bf16.mxu0 0
    %268 = vmatpush2.bf16.msra.mxu0 0
    %269 = vmatprep.mubr.bf16.mxu0 0
    %270 = vmatmul.mubr.bf16.gmra.mxu0 %v173
    %v271 = vpop.f32.mrf.mxu0
    %v272 = vadd.f32 0.0, %v271
    %v273 = vpop.f32.mrf.mxu0
    %v274 = vpop.f32.mrf.mxu0
    %v275 = vadd.f32 0.0, %v274
    %v276 = vpop.f32.mrf.mxu0
    %277 = vmatprep.mubr.bf16.mxu0 0
    %278 = vmatmul.mubr.bf16.gmra.mxu0 %v174
    %v279 = vpop.f32.mrf.mxu0
    %v280 = vadd.f32 0.0, %v279
    %v281 = vpop.f32.mrf.mxu0
    %v282 = vpop.f32.mrf.mxu0
    %v283 = vadd.f32 0.0, %v282
    %v284 = vpop.f32.mrf.mxu0
    %285 = vmatprep.mubr.bf16.mxu0 0
    %286 = vmatmul.mubr.bf16.gmra.mxu0 %v175
    %v287 = vpop.f32.mrf.mxu0
    %v288 = vadd.f32 0.0, %v287
    %v289 = vpop.f32.mrf.mxu0
    %v290 = vpop.f32.mrf.mxu0
    %v291 = vadd.f32 0.0, %v290
    %v292 = vpop.f32.mrf.mxu0
    %293 = vmatprep.mubr.bf16.mxu0 0
    %294 = vmatmul.mubr.bf16.gmra.mxu0 %v176
    %v295 = vpop.f32.mrf.mxu0
    %v296 = vadd.f32 0.0, %v295
    %v297 = vpop.f32.mrf.mxu0
    %v298 = vpop.f32.mrf.mxu0
    %v299 = vadd.f32 0.0, %v298
    %v300 = vpop.f32.mrf.mxu0
    %301 = vmatprep.mubr.bf16.mxu0 0
    %302 = vmatmul.mubr.bf16.gmra.mxu0 %v177
    %v303 = vpop.f32.mrf.mxu0
    %v304 = vadd.f32 0.0, %v303
    %v305 = vpop.f32.mrf.mxu0
    %v306 = vpop.f32.mrf.mxu0
    %v307 = vadd.f32 0.0, %v306
    %v308 = vpop.f32.mrf.mxu0
    %309 = vmatprep.mubr.bf16.mxu0 0
    %310 = vmatmul.mubr.bf16.gmra.mxu0 %v178
    %v311 = vpop.f32.mrf.mxu0
    %v312 = vadd.f32 0.0, %v311
    %v313 = vpop.f32.mrf.mxu0
    %v314 = vpop.f32.mrf.mxu0
    %v315 = vadd.f32 0.0, %v314
    %v316 = vpop.f32.mrf.mxu0
    %317 = vmatprep.mubr.bf16.mxu0 0
    %318 = vmatmul.mubr.bf16.gmra.mxu0 %v179
    %v319 = vpop.f32.mrf.mxu0
    %v320 = vadd.f32 0.0, %v319
    %v321 = vpop.f32.mrf.mxu0
    %v322 = vpop.f32.mrf.mxu0
    %v323 = vadd.f32 0.0, %v322
    %v324 = vpop.f32.mrf.mxu0
    %325 = vmatprep.mubr.bf16.mxu0 0
    %326 = vmatmul.mubr.bf16.gmra.mxu0 %v180
    %v327 = vpop.f32.mrf.mxu0
    %v328 = vadd.f32 0.0, %v327
    %v329 = vpop.f32.mrf.mxu0
    %v330 = vpop.f32.mrf.mxu0
    %v331 = vadd.f32 0.0, %v330
    %v332 = vpop.f32.mrf.mxu0
    %333 = vdwg.mxu0
    %v334 = vpack.c.bf16 %v275, %v272
    %v335 = vpack.c.bf16 %v283, %v280
    %v336 = vpack.c.bf16 %v291, %v288
    %v337 = vpack.c.bf16 %v299, %v296
    %v338 = vpack.c.bf16 %v307, %v304
    %v339 = vpack.c.bf16 %v315, %v312
    %v340 = vpack.c.bf16 %v323, %v320
    %v341 = vpack.c.bf16 %v331, %v328
    %v358 = vunpack.c.l.b16 %v93
    %v359 = vunpack.c.l.b16 %v94
    %v360 = vunpack.c.l.b16 %v95
    %v361 = vunpack.c.l.b16 %v96
    %v362 = vunpack.c.l.b16 %v97
    %v363 = vunpack.c.l.b16 %v98
    %v364 = vunpack.c.l.b16 %v99
    %v365 = vunpack.c.l.b16 %v100
    %v366 = vunpack.c.l.b16 %v101
    %v367 = vunpack.c.l.b16 %v102
    %v368 = vunpack.c.l.b16 %v103
    %v369 = vunpack.c.l.b16 %v104
    %v370 = vunpack.c.l.b16 %v105
    %v371 = vunpack.c.l.b16 %v106
    %v372 = vunpack.c.l.b16 %v107
    %v373 = vunpack.c.l.b16 %v108
    %v374 = vpack.c.b16 %v359, %v358
    %v375 = vpack.c.b16 %v361, %v360
    %v376 = vpack.c.b16 %v363, %v362
    %v377 = vpack.c.b16 %v365, %v364
    %v378 = vpack.c.b16 %v367, %v366
    %v379 = vpack.c.b16 %v369, %v368
    %v380 = vpack.c.b16 %v371, %v370
    %v381 = vpack.c.b16 %v373, %v372
    %390 = vmatprep.subr.bf16.mxu0 0
    %391 = vmatpush1.bf16.msra.mxu0 %v341
    %392 = vmatprep.subr.bf16.mxu0 0
    %393 = vmatpush1.bf16.msra.mxu0 %v340
    %394 = vmatprep.subr.bf16.mxu0 0
    %395 = vmatpush1.bf16.msra.mxu0 %v339
    %396 = vmatprep.subr.bf16.mxu0 0
    %397 = vmatpush1.bf16.msra.mxu0 %v338
    %398 = vmatprep.subr.bf16.mxu0 0
    %399 = vmatpush1.bf16.msra.mxu0 %v337
    %400 = vmatprep.subr.bf16.mxu0 0
    %401 = vmatpush1.bf16.msra.mxu0 %v336
    %402 = vmatprep.subr.bf16.mxu0 0
    %403 = vmatpush1.bf16.msra.mxu0 %v335
    %404 = vmatprep.subr.bf16.mxu0 0
    %405 = vmatpush1.bf16.msra.mxu0 %v334
    %406 = vmatprep.subr.bf16.mxu0 0
    %407 = vmatpush2.bf16.msra.mxu0 0
    %408 = vmatprep.subr.bf16.mxu0 0
    %409 = vmatpush2.bf16.msra.mxu0 0
    %410 = vmatprep.subr.bf16.mxu0 0
    %411 = vmatpush2.bf16.msra.mxu0 0
    %412 = vmatprep.subr.bf16.mxu0 0
    %413 = vmatpush2.bf16.msra.mxu0 0
    %414 = vmatprep.subr.bf16.mxu0 0
    %415 = vmatpush2.bf16.msra.mxu0 0
    %416 = vmatprep.subr.bf16.mxu0 0
    %417 = vmatpush2.bf16.msra.mxu0 0
    %418 = vmatprep.subr.bf16.mxu0 0
    %419 = vmatpush2.bf16.msra.mxu0 0
    %420 = vmatprep.subr.bf16.mxu0 0
    %421 = vmatpush2.bf16.msra.mxu0 0
    %422 = vmatprep.mubr.bf16.mxu0 0
    %423 = vmatmul.mubr.bf16.gmra.mxu0 %v374
    %v424 = vpop.f32.mrf.mxu0
    %v425 = vadd.f32 0.0, %v424
    %v426 = vpop.f32.mrf.mxu0
    %v427 = vpop.f32.mrf.mxu0
    %v428 = vadd.f32 0.0, %v427
    %v429 = vpop.f32.mrf.mxu0
    %430 = vmatprep.mubr.bf16.mxu0 0
    %431 = vmatmul.mubr.bf16.gmra.mxu0 %v375
    %v432 = vpop.f32.mrf.mxu0
    %v433 = vadd.f32 0.0, %v432
    %v434 = vpop.f32.mrf.mxu0
    %v435 = vpop.f32.mrf.mxu0
    %v436 = vadd.f32 0.0, %v435
    %v437 = vpop.f32.mrf.mxu0
    %438 = vmatprep.mubr.bf16.mxu0 0
    %439 = vmatmul.mubr.bf16.gmra.mxu0 %v376
    %v440 = vpop.f32.mrf.mxu0
    %v441 = vadd.f32 0.0, %v440
    %v442 = vpop.f32.mrf.mxu0
    %v443 = vpop.f32.mrf.mxu0
    %v444 = vadd.f32 0.0, %v443
    %v445 = vpop.f32.mrf.mxu0
    %446 = vmatprep.mubr.bf16.mxu0 0
    %447 = vmatmul.mubr.bf16.gmra.mxu0 %v377
    %v448 = vpop.f32.mrf.mxu0
    %v449 = vadd.f32 0.0, %v448
    %v450 = vpop.f32.mrf.mxu0
    %v451 = vpop.f32.mrf.mxu0
    %v452 = vadd.f32 0.0, %v451
    %v453 = vpop.f32.mrf.mxu0
    %454 = vmatprep.mubr.bf16.mxu0 0
    %455 = vmatmul.mubr.bf16.gmra.mxu0 %v378
    %v456 = vpop.f32.mrf.mxu0
    %v457 = vadd.f32 0.0, %v456
    %v458 = vpop.f32.mrf.mxu0
    %v459 = vpop.f32.mrf.mxu0
    %v460 = vadd.f32 0.0, %v459
    %v461 = vpop.f32.mrf.mxu0
    %462 = vmatprep.mubr.bf16.mxu0 0
    %463 = vmatmul.mubr.bf16.gmra.mxu0 %v379
    %v464 = vpop.f32.mrf.mxu0
    %v465 = vadd.f32 0.0, %v464
    %v466 = vpop.f32.mrf.mxu0
    %v467 = vpop.f32.mrf.mxu0
    %v468 = vadd.f32 0.0, %v467
    %v469 = vpop.f32.mrf.mxu0
    %470 = vmatprep.mubr.bf16.mxu0 0
    %471 = vmatmul.mubr.bf16.gmra.mxu0 %v380
    %v472 = vpop.f32.mrf.mxu0
    %v473 = vadd.f32 0.0, %v472
    %v474 = vpop.f32.mrf.mxu0
    %v475 = vpop.f32.mrf.mxu0
    %v476 = vadd.f32 0.0, %v475
    %v477 = vpop.f32.mrf.mxu0
    %478 = vmatprep.mubr.bf16.mxu0 0
    %479 = vmatmul.mubr.bf16.gmra.mxu0 %v381
    %v480 = vpop.f32.mrf.mxu0
    %v481 = vadd.f32 0.0, %v480
    %v482 = vpop.f32.mrf.mxu0
    %v483 = vpop.f32.mrf.mxu0
    %v484 = vadd.f32 0.0, %v483
    %v485 = vpop.f32.mrf.mxu0
    %486 = vdwg.mxu0
    %v487 = vmax.f32 %v425, 0.0
    %v488 = vmax.f32 %v428, 0.0
    %v489 = vmax.f32 %v433, 0.0
    %v490 = vmax.f32 %v436, 0.0
    %v491 = vmax.f32 %v441, 0.0
    %v492 = vmax.f32 %v444, 0.0
    %v493 = vmax.f32 %v449, 0.0
    %v494 = vmax.f32 %v452, 0.0
    %v495 = vmax.f32 %v457, 0.0
    %v496 = vmax.f32 %v460, 0.0
    %v497 = vmax.f32 %v465, 0.0
    %v498 = vmax.f32 %v468, 0.0
    %v499 = vmax.f32 %v473, 0.0
    %v500 = vmax.f32 %v476, 0.0
    %v501 = vmax.f32 %v481, 0.0
    %v502 = vmax.f32 %v484, 0.0
    %v503 = vpack.c.bf16 %v488, %v487
    %v504 = vpack.c.bf16 %v490, %v489
    %v505 = vpack.c.bf16 %v492, %v491
    %v506 = vpack.c.bf16 %v494, %v493
    %v507 = vpack.c.bf16 %v496, %v495
    %v508 = vpack.c.bf16 %v498, %v497
    %v509 = vpack.c.bf16 %v500, %v499
    %v510 = vpack.c.bf16 %v502, %v501
    %v511 = vld [vmem:[#allocation8] sm:$0xf]
    %v512 = vld [vmem:[#allocation8 + $0x4] sm:$0xf]
    %v513 = vld [vmem:[#allocation8 + $0x8] sm:$0xf]
    %v514 = vld [vmem:[#allocation8 + $0xc] sm:$0xf]
    %v515 = vld [vmem:[#allocation8 + $0x10] sm:$0xf]
    %v516 = vld [vmem:[#allocation8 + $0x14] sm:$0xf]
    %v517 = vld [vmem:[#allocation8 + $0x18] sm:$0xf]
    %v518 = vld [vmem:[#allocation8 + $0x1c] sm:$0xf]
    %v519 = vld [vmem:[#allocation8 + $0x20] sm:$0xf]
    %v520 = vld [vmem:[#allocation8 + $0x24] sm:$0xf]
    %v521 = vld [vmem:[#allocation8 + $0x28] sm:$0xf]
    %v522 = vld [vmem:[#allocation8 + $0x2c] sm:$0xf]
    %v523 = vld [vmem:[#allocation8 + $0x30] sm:$0xf]
    %v524 = vld [vmem:[#allocation8 + $0x34] sm:$0xf]
    %v525 = vld [vmem:[#allocation8 + $0x38] sm:$0xf]
    %v526 = vld [vmem:[#allocation8 + $0x3c] sm:$0xf]
    %v543 = vunpack.c.l.b16 %v511
    %v544 = vunpack.c.l.b16 %v512
    %v545 = vunpack.c.l.b16 %v513
    %v546 = vunpack.c.l.b16 %v514
    %v547 = vunpack.c.l.b16 %v515
    %v548 = vunpack.c.l.b16 %v516
    %v549 = vunpack.c.l.b16 %v517
    %v550 = vunpack.c.l.b16 %v518
    %v551 = vunpack.c.l.b16 %v519
    %v552 = vunpack.c.l.b16 %v520
    %v553 = vunpack.c.l.b16 %v521
    %v554 = vunpack.c.l.b16 %v522
    %v555 = vunpack.c.l.b16 %v523
    %v556 = vunpack.c.l.b16 %v524
    %v557 = vunpack.c.l.b16 %v525
    %v558 = vunpack.c.l.b16 %v526
    %v559 = vpack.c.b16 %v544, %v543
    %v560 = vpack.c.b16 %v546, %v545
    %v561 = vpack.c.b16 %v548, %v547
    %v562 = vpack.c.b16 %v550, %v549
    %v563 = vpack.c.b16 %v552, %v551
    %v564 = vpack.c.b16 %v554, %v553
    %v565 = vpack.c.b16 %v556, %v555
    %v566 = vpack.c.b16 %v558, %v557
    %575 = vmatprep.subr.bf16.mxu0 0
    %576 = vmatpush1.bf16.msra.mxu0 %v566
    %577 = vmatprep.subr.bf16.mxu0 0
    %578 = vmatpush1.bf16.msra.mxu0 %v565
    %579 = vmatprep.subr.bf16.mxu0 0
    %580 = vmatpush1.bf16.msra.mxu0 %v564
    %581 = vmatprep.subr.bf16.mxu0 0
    %582 = vmatpush1.bf16.msra.mxu0 %v563
    %583 = vmatprep.subr.bf16.mxu0 0
    %584 = vmatpush1.bf16.msra.mxu0 %v562
    %585 = vmatprep.subr.bf16.mxu0 0
    %586 = vmatpush1.bf16.msra.mxu0 %v561
    %587 = vmatprep.subr.bf16.mxu0 0
    %588 = vmatpush1.bf16.msra.mxu0 %v560
    %589 = vmatprep.subr.bf16.mxu0 0
    %590 = vmatpush1.bf16.msra.mxu0 %v559
    %591 = vmatprep.subr.bf16.mxu0 0
    %592 = vmatpush2.bf16.msra.mxu0 0
    %593 = vmatprep.subr.bf16.mxu0 0
    %594 = vmatpush2.bf16.msra.mxu0 0
    %595 = vmatprep.subr.bf16.mxu0 0
    %596 = vmatpush2.bf16.msra.mxu0 0
    %597 = vmatprep.subr.bf16.mxu0 0
    %598 = vmatpush2.bf16.msra.mxu0 0
    %599 = vmatprep.subr.bf16.mxu0 0
    %600 = vmatpush2.bf16.msra.mxu0 0
    %601 = vmatprep.subr.bf16.mxu0 0
    %602 = vmatpush2.bf16.msra.mxu0 0
    %603 = vmatprep.subr.bf16.mxu0 0
    %604 = vmatpush2.bf16.msra.mxu0 0
    %605 = vmatprep.subr.bf16.mxu0 0
    %606 = vmatpush2.bf16.msra.mxu0 0
    %607 = vmatprep.mubr.bf16.mxu0 0
    %608 = vmatmul.mubr.bf16.gmra.mxu0 %v503
    %v609 = vpop.f32.mrf.mxu0
    %v610 = vadd.f32 0.0, %v609
    %v611 = vpop.f32.mrf.mxu0
    %v612 = vpop.f32.mrf.mxu0
    %v613 = vadd.f32 0.0, %v612
    %v614 = vpop.f32.mrf.mxu0
    %615 = vmatprep.mubr.bf16.mxu0 0
    %616 = vmatmul.mubr.bf16.gmra.mxu0 %v504
    %v617 = vpop.f32.mrf.mxu0
    %v618 = vadd.f32 0.0, %v617
    %v619 = vpop.f32.mrf.mxu0
    %v620 = vpop.f32.mrf.mxu0
    %v621 = vadd.f32 0.0, %v620
    %v622 = vpop.f32.mrf.mxu0
    %623 = vmatprep.mubr.bf16.mxu0 0
    %624 = vmatmul.mubr.bf16.gmra.mxu0 %v505
    %v625 = vpop.f32.mrf.mxu0
    %v626 = vadd.f32 0.0, %v625
    %v627 = vpop.f32.mrf.mxu0
    %v628 = vpop.f32.mrf.mxu0
    %v629 = vadd.f32 0.0, %v628
    %v630 = vpop.f32.mrf.mxu0
    %631 = vmatprep.mubr.bf16.mxu0 0
    %632 = vmatmul.mubr.bf16.gmra.mxu0 %v506
    %v633 = vpop.f32.mrf.mxu0
    %v634 = vadd.f32 0.0, %v633
    %v635 = vpop.f32.mrf.mxu0
    %v636 = vpop.f32.mrf.mxu0
    %v637 = vadd.f32 0.0, %v636
    %v638 = vpop.f32.mrf.mxu0
    %639 = vmatprep.mubr.bf16.mxu0 0
    %640 = vmatmul.mubr.bf16.gmra.mxu0 %v507
    %v641 = vpop.f32.mrf.mxu0
    %v642 = vadd.f32 0.0, %v641
    %v643 = vpop.f32.mrf.mxu0
    %v644 = vpop.f32.mrf.mxu0
    %v645 = vadd.f32 0.0, %v644
    %v646 = vpop.f32.mrf.mxu0
    %647 = vmatprep.mubr.bf16.mxu0 0
    %648 = vmatmul.mubr.bf16.gmra.mxu0 %v508
    %v649 = vpop.f32.mrf.mxu0
    %v650 = vadd.f32 0.0, %v649
    %v651 = vpop.f32.mrf.mxu0
    %v652 = vpop.f32.mrf.mxu0
    %v653 = vadd.f32 0.0, %v652
    %v654 = vpop.f32.mrf.mxu0
    %655 = vmatprep.mubr.bf16.mxu0 0
    %656 = vmatmul.mubr.bf16.gmra.mxu0 %v509
    %v657 = vpop.f32.mrf.mxu0
    %v658 = vadd.f32 0.0, %v657
    %v659 = vpop.f32.mrf.mxu0
    %v660 = vpop.f32.mrf.mxu0
    %v661 = vadd.f32 0.0, %v660
    %v662 = vpop.f32.mrf.mxu0
    %663 = vmatprep.mubr.bf16.mxu0 0
    %664 = vmatmul.mubr.bf16.gmra.mxu0 %v510
    %v665 = vpop.f32.mrf.mxu0
    %v666 = vadd.f32 0.0, %v665
    %v667 = vpop.f32.mrf.mxu0
    %v668 = vpop.f32.mrf.mxu0
    %v669 = vadd.f32 0.0, %v668
    %v670 = vpop.f32.mrf.mxu0
    %671 = vdwg.mxu0
    %v672 = vpack.c.bf16 %v613, %v610
    %v673 = vpack.c.bf16 %v621, %v618
    %v674 = vpack.c.bf16 %v629, %v626
    %v675 = vpack.c.bf16 %v637, %v634
    %v676 = vpack.c.bf16 %v645, %v642
    %v677 = vpack.c.bf16 %v653, %v650
    %v678 = vpack.c.bf16 %v661, %v658
    %v679 = vpack.c.bf16 %v669, %v666
    %680 = vmatprep.subr.bf16.mxu0 0
    %681 = vmatpush1.bf16.msra.mxu0 %v679
    %682 = vmatprep.subr.bf16.mxu0 0
    %683 = vmatpush1.bf16.msra.mxu0 %v678
    %684 = vmatprep.subr.bf16.mxu0 0
    %685 = vmatpush1.bf16.msra.mxu0 %v677
    %686 = vmatprep.subr.bf16.mxu0 0
    %687 = vmatpush1.bf16.msra.mxu0 %v676
    %688 = vmatprep.subr.bf16.mxu0 0
    %689 = vmatpush1.bf16.msra.mxu0 %v675
    %690 = vmatprep.subr.bf16.mxu0 0
    %691 = vmatpush1.bf16.msra.mxu0 %v674
    %692 = vmatprep.subr.bf16.mxu0 0
    %693 = vmatpush1.bf16.msra.mxu0 %v673
    %694 = vmatprep.subr.bf16.mxu0 0
    %695 = vmatpush1.bf16.msra.mxu0 %v672
    %696 = vmatprep.subr.bf16.mxu0 0
    %697 = vmatpush2.bf16.msra.mxu0 0
    %698 = vmatprep.subr.bf16.mxu0 0
    %699 = vmatpush2.bf16.msra.mxu0 0
    %700 = vmatprep.subr.bf16.mxu0 0
    %701 = vmatpush2.bf16.msra.mxu0 0
    %702 = vmatprep.subr.bf16.mxu0 0
    %703 = vmatpush2.bf16.msra.mxu0 0
    %704 = vmatprep.subr.bf16.mxu0 0
    %705 = vmatpush2.bf16.msra.mxu0 0
    %706 = vmatprep.subr.bf16.mxu0 0
    %707 = vmatpush2.bf16.msra.mxu0 0
    %708 = vmatprep.subr.bf16.mxu0 0
    %709 = vmatpush2.bf16.msra.mxu0 0
    %710 = vmatprep.subr.bf16.mxu0 0
    %711 = vmatpush2.bf16.msra.mxu0 0
    %712 = vmatprep.mubr.bf16.mxu0 0
    %713 = vmatmul.mubr.bf16.gmra.mxu0 %v374
    %v714 = vpop.f32.mrf.mxu0
    %v715 = vadd.f32 0.0, %v714
    %v716 = vpop.f32.mrf.mxu0
    %v717 = vpop.f32.mrf.mxu0
    %v718 = vadd.f32 0.0, %v717
    %v719 = vpop.f32.mrf.mxu0
    %720 = vmatprep.mubr.bf16.mxu0 0
    %721 = vmatmul.mubr.bf16.gmra.mxu0 %v375
    %v722 = vpop.f32.mrf.mxu0
    %v723 = vadd.f32 0.0, %v722
    %v724 = vpop.f32.mrf.mxu0
    %v725 = vpop.f32.mrf.mxu0
    %v726 = vadd.f32 0.0, %v725
    %v727 = vpop.f32.mrf.mxu0
    %728 = vmatprep.mubr.bf16.mxu0 0
    %729 = vmatmul.mubr.bf16.gmra.mxu0 %v376
    %v730 = vpop.f32.mrf.mxu0
    %v731 = vadd.f32 0.0, %v730
    %v732 = vpop.f32.mrf.mxu0
    %v733 = vpop.f32.mrf.mxu0
    %v734 = vadd.f32 0.0, %v733
    %v735 = vpop.f32.mrf.mxu0
    %736 = vmatprep.mubr.bf16.mxu0 0
    %737 = vmatmul.mubr.bf16.gmra.mxu0 %v377
    %v738 = vpop.f32.mrf.mxu0
    %v739 = vadd.f32 0.0, %v738
    %v740 = vpop.f32.mrf.mxu0
    %v741 = vpop.f32.mrf.mxu0
    %v742 = vadd.f32 0.0, %v741
    %v743 = vpop.f32.mrf.mxu0
    %744 = vmatprep.mubr.bf16.mxu0 0
    %745 = vmatmul.mubr.bf16.gmra.mxu0 %v378
    %v746 = vpop.f32.mrf.mxu0
    %v747 = vadd.f32 0.0, %v746
    %v748 = vpop.f32.mrf.mxu0
    %v749 = vpop.f32.mrf.mxu0
    %v750 = vadd.f32 0.0, %v749
    %v751 = vpop.f32.mrf.mxu0
    %752 = vmatprep.mubr.bf16.mxu0 0
    %753 = vmatmul.mubr.bf16.gmra.mxu0 %v379
    %v754 = vpop.f32.mrf.mxu0
    %v755 = vadd.f32 0.0, %v754
    %v756 = vpop.f32.mrf.mxu0
    %v757 = vpop.f32.mrf.mxu0
    %v758 = vadd.f32 0.0, %v757
    %v759 = vpop.f32.mrf.mxu0
    %760 = vmatprep.mubr.bf16.mxu0 0
    %761 = vmatmul.mubr.bf16.gmra.mxu0 %v380
    %v762 = vpop.f32.mrf.mxu0
    %v763 = vadd.f32 0.0, %v762
    %v764 = vpop.f32.mrf.mxu0
    %v765 = vpop.f32.mrf.mxu0
    %v766 = vadd.f32 0.0, %v765
    %v767 = vpop.f32.mrf.mxu0
    %768 = vmatprep.mubr.bf16.mxu0 0
    %769 = vmatmul.mubr.bf16.gmra.mxu0 %v381
    %v770 = vpop.f32.mrf.mxu0
    %v771 = vadd.f32 0.0, %v770
    %v772 = vpop.f32.mrf.mxu0
    %v773 = vpop.f32.mrf.mxu0
    %v774 = vadd.f32 0.0, %v773
    %v775 = vpop.f32.mrf.mxu0
    %776 = vdwg.mxu0
    %v777 = vpack.c.bf16 %v718, %v715
    %v778 = vpack.c.bf16 %v726, %v723
    %v779 = vpack.c.bf16 %v734, %v731
    %v780 = vpack.c.bf16 %v742, %v739
    %v781 = vpack.c.bf16 %v750, %v747
    %v782 = vpack.c.bf16 %v758, %v755
    %v783 = vpack.c.bf16 %v766, %v763
    %v784 = vpack.c.bf16 %v774, %v771
    %v785 = vld [vmem:[#allocation10] sm:$0xf]
    %v786 = vld [vmem:[#allocation10 + $0x4] sm:$0xf]
    %v787 = vld [vmem:[#allocation10 + $0x8] sm:$0xf]
    %v788 = vld [vmem:[#allocation10 + $0xc] sm:$0xf]
    %v789 = vld [vmem:[#allocation10 + $0x10] sm:$0xf]
    %v790 = vld [vmem:[#allocation10 + $0x14] sm:$0xf]
    %v791 = vld [vmem:[#allocation10 + $0x18] sm:$0xf]
    %v792 = vld [vmem:[#allocation10 + $0x1c] sm:$0xf]
    %v793 = vld [vmem:[#allocation10 + $0x20] sm:$0xf]
    %v794 = vld [vmem:[#allocation10 + $0x24] sm:$0xf]
    %v795 = vld [vmem:[#allocation10 + $0x28] sm:$0xf]
    %v796 = vld [vmem:[#allocation10 + $0x2c] sm:$0xf]
    %v797 = vld [vmem:[#allocation10 + $0x30] sm:$0xf]
    %v798 = vld [vmem:[#allocation10 + $0x34] sm:$0xf]
    %v799 = vld [vmem:[#allocation10 + $0x38] sm:$0xf]
    %v800 = vld [vmem:[#allocation10 + $0x3c] sm:$0xf]
    %v817 = vunpack.c.l.b16 %v785
    %v818 = vunpack.c.l.b16 %v786
    %v819 = vunpack.c.l.b16 %v787
    %v820 = vunpack.c.l.b16 %v788
    %v821 = vunpack.c.l.b16 %v789
    %v822 = vunpack.c.l.b16 %v790
    %v823 = vunpack.c.l.b16 %v791
    %v824 = vunpack.c.l.b16 %v792
    %v825 = vunpack.c.l.b16 %v793
    %v826 = vunpack.c.l.b16 %v794
    %v827 = vunpack.c.l.b16 %v795
    %v828 = vunpack.c.l.b16 %v796
    %v829 = vunpack.c.l.b16 %v797
    %v830 = vunpack.c.l.b16 %v798
    %v831 = vunpack.c.l.b16 %v799
    %v832 = vunpack.c.l.b16 %v800
    %v833 = vpack.c.b16 %v818, %v817
    %v834 = vpack.c.b16 %v820, %v819
    %v835 = vpack.c.b16 %v822, %v821
    %v836 = vpack.c.b16 %v824, %v823
    %v837 = vpack.c.b16 %v826, %v825
    %v838 = vpack.c.b16 %v828, %v827
    %v839 = vpack.c.b16 %v830, %v829
    %v840 = vpack.c.b16 %v832, %v831
    %849 = vmatprep.subr.bf16.mxu0 0
    %850 = vmatpush1.bf16.msra.mxu0 %v784
    %851 = vmatprep.subr.bf16.mxu0 0
    %852 = vmatpush1.bf16.msra.mxu0 %v783
    %853 = vmatprep.subr.bf16.mxu0 0
    %854 = vmatpush1.bf16.msra.mxu0 %v782
    %855 = vmatprep.subr.bf16.mxu0 0
    %856 = vmatpush1.bf16.msra.mxu0 %v781
    %857 = vmatprep.subr.bf16.mxu0 0
    %858 = vmatpush1.bf16.msra.mxu0 %v780
    %859 = vmatprep.subr.bf16.mxu0 0
    %860 = vmatpush1.bf16.msra.mxu0 %v779
    %861 = vmatprep.subr.bf16.mxu0 0
    %862 = vmatpush1.bf16.msra.mxu0 %v778
    %863 = vmatprep.subr.bf16.mxu0 0
    %864 = vmatpush1.bf16.msra.mxu0 %v777
    %865 = vmatprep.subr.bf16.mxu0 0
    %866 = vmatpush2.bf16.msra.mxu0 0
    %867 = vmatprep.subr.bf16.mxu0 0
    %868 = vmatpush2.bf16.msra.mxu0 0
    %869 = vmatprep.subr.bf16.mxu0 0
    %870 = vmatpush2.bf16.msra.mxu0 0
    %871 = vmatprep.subr.bf16.mxu0 0
    %872 = vmatpush2.bf16.msra.mxu0 0
    %873 = vmatprep.subr.bf16.mxu0 0
    %874 = vmatpush2.bf16.msra.mxu0 0
    %875 = vmatprep.subr.bf16.mxu0 0
    %876 = vmatpush2.bf16.msra.mxu0 0
    %877 = vmatprep.subr.bf16.mxu0 0
    %878 = vmatpush2.bf16.msra.mxu0 0
    %879 = vmatprep.subr.bf16.mxu0 0
    %880 = vmatpush2.bf16.msra.mxu0 0
    %881 = vmatprep.mubr.bf16.mxu0 0
    %882 = vmatmul.mubr.bf16.gmra.mxu0 %v833
    %v883 = vpop.f32.mrf.mxu0
    %v884 = vadd.f32 0.0, %v883
    %v885 = vpop.f32.mrf.mxu0
    %v886 = vpop.f32.mrf.mxu0
    %v887 = vadd.f32 0.0, %v886
    %v888 = vpop.f32.mrf.mxu0
    %889 = vmatprep.mubr.bf16.mxu0 0
    %890 = vmatmul.mubr.bf16.gmra.mxu0 %v834
    %v891 = vpop.f32.mrf.mxu0
    %v892 = vadd.f32 0.0, %v891
    %v893 = vpop.f32.mrf.mxu0
    %v894 = vpop.f32.mrf.mxu0
    %v895 = vadd.f32 0.0, %v894
    %v896 = vpop.f32.mrf.mxu0
    %897 = vmatprep.mubr.bf16.mxu0 0
    %898 = vmatmul.mubr.bf16.gmra.mxu0 %v835
    %v899 = vpop.f32.mrf.mxu0
    %v900 = vadd.f32 0.0, %v899
    %v901 = vpop.f32.mrf.mxu0
    %v902 = vpop.f32.mrf.mxu0
    %v903 = vadd.f32 0.0, %v902
    %v904 = vpop.f32.mrf.mxu0
    %905 = vmatprep.mubr.bf16.mxu0 0
    %906 = vmatmul.mubr.bf16.gmra.mxu0 %v836
    %v907 = vpop.f32.mrf.mxu0
    %v908 = vadd.f32 0.0, %v907
    %v909 = vpop.f32.mrf.mxu0
    %v910 = vpop.f32.mrf.mxu0
    %v911 = vadd.f32 0.0, %v910
    %v912 = vpop.f32.mrf.mxu0
    %913 = vmatprep.mubr.bf16.mxu0 0
    %914 = vmatmul.mubr.bf16.gmra.mxu0 %v837
    %v915 = vpop.f32.mrf.mxu0
    %v916 = vadd.f32 0.0, %v915
    %v917 = vpop.f32.mrf.mxu0
    %v918 = vpop.f32.mrf.mxu0
    %v919 = vadd.f32 0.0, %v918
    %v920 = vpop.f32.mrf.mxu0
    %921 = vmatprep.mubr.bf16.mxu0 0
    %922 = vmatmul.mubr.bf16.gmra.mxu0 %v838
    %v923 = vpop.f32.mrf.mxu0
    %v924 = vadd.f32 0.0, %v923
    %v925 = vpop.f32.mrf.mxu0
    %v926 = vpop.f32.mrf.mxu0
    %v927 = vadd.f32 0.0, %v926
    %v928 = vpop.f32.mrf.mxu0
    %929 = vmatprep.mubr.bf16.mxu0 0
    %930 = vmatmul.mubr.bf16.gmra.mxu0 %v839
    %v931 = vpop.f32.mrf.mxu0
    %v932 = vadd.f32 0.0, %v931
    %v933 = vpop.f32.mrf.mxu0
    %v934 = vpop.f32.mrf.mxu0
    %v935 = vadd.f32 0.0, %v934
    %v936 = vpop.f32.mrf.mxu0
    %937 = vmatprep.mubr.bf16.mxu0 0
    %938 = vmatmul.mubr.bf16.gmra.mxu0 %v840
    %v939 = vpop.f32.mrf.mxu0
    %v940 = vadd.f32 0.0, %v939
    %v941 = vpop.f32.mrf.mxu0
    %v942 = vpop.f32.mrf.mxu0
    %v943 = vadd.f32 0.0, %v942
    %v944 = vpop.f32.mrf.mxu0
    %945 = vdwg.mxu0
    %v946 = vmul.f32 %v884, 0.5
    %v947 = vmul.f32 %v887, 0.5
    %v948 = vmul.f32 %v892, 0.5
    %v949 = vmul.f32 %v895, 0.5
    %v950 = vmul.f32 %v900, 0.5
    %v951 = vmul.f32 %v903, 0.5
    %v952 = vmul.f32 %v908, 0.5
    %v953 = vmul.f32 %v911, 0.5
    %v954 = vmul.f32 %v916, 0.5
    %v955 = vmul.f32 %v919, 0.5
    %v956 = vmul.f32 %v924, 0.5
    %v957 = vmul.f32 %v927, 0.5
    %v958 = vmul.f32 %v932, 0.5
    %v959 = vmul.f32 %v935, 0.5
    %v960 = vmul.f32 %v940, 0.5
    %v961 = vmul.f32 %v943, 0.5
    %v962 = vld [vmem:[%s5] sm:$0xf]
    %v963 = vld [vmem:[%s5 + $0x4] sm:$0xf]
    %v966 = vunpack.c.l.b16 %v962
    %v967 = vunpack.c.l.b16 %v963
    %v968 = vpack.c.b16 %v967, %v966
    %970 = vmatprep.subr.bf16.mxu0 0
    %971 = vmatpush1.bf16.msra.mxu0 %v784
    %972 = vmatprep.subr.bf16.mxu0 0
    %973 = vmatpush1.bf16.msra.mxu0 %v783
    %974 = vmatprep.subr.bf16.mxu0 0
    %975 = vmatpush1.bf16.msra.mxu0 %v782
    %976 = vmatprep.subr.bf16.mxu0 0
    %977 = vmatpush1.bf16.msra.mxu0 %v781
    %978 = vmatprep.subr.bf16.mxu0 0
    %979 = vmatpush1.bf16.msra.mxu0 %v780
    %980 = vmatprep.subr.bf16.mxu0 0
    %981 = vmatpush1.bf16.msra.mxu0 %v779
    %982 = vmatprep.subr.bf16.mxu0 0
    %983 = vmatpush1.bf16.msra.mxu0 %v778
    %984 = vmatprep.subr.bf16.mxu0 0
    %985 = vmatpush1.bf16.msra.mxu0 %v777
    %986 = vmatprep.subr.bf16.mxu0 0
    %987 = vmatpush2.bf16.msra.mxu0 0
    %988 = vmatprep.subr.bf16.mxu0 0
    %989 = vmatpush2.bf16.msra.mxu0 0
    %990 = vmatprep.subr.bf16.mxu0 0
    %991 = vmatpush2.bf16.msra.mxu0 0
    %992 = vmatprep.subr.bf16.mxu0 0
    %993 = vmatpush2.bf16.msra.mxu0 0
    %994 = vmatprep.subr.bf16.mxu0 0
    %995 = vmatpush2.bf16.msra.mxu0 0
    %996 = vmatprep.subr.bf16.mxu0 0
    %997 = vmatpush2.bf16.msra.mxu0 0
    %998 = vmatprep.subr.bf16.mxu0 0
    %999 = vmatpush2.bf16.msra.mxu0 0
    %1000 = vmatprep.subr.bf16.mxu0 0
    %1001 = vmatpush2.bf16.msra.mxu0 0
    %1002 = vmatprep.mubr.bf16.mxu0 0
    %1003 = vmatmul.mubr.bf16.gmra.mxu0 %v968
    %v1004 = vpop.f32.mrf.mxu0
    %v1005 = vadd.f32 0.0, %v1004
    %v1006 = vpop.f32.mrf.mxu0
    %v1007 = vpop.f32.mrf.mxu0
    %v1008 = vadd.f32 0.0, %v1007
    %v1009 = vpop.f32.mrf.mxu0
    %1010 = vdwg.mxu0
    %v1011 = vmul.f32 %v1005, %v1005
    %v1012 = vmul.f32 %v1008, %v1008
    %1013 = vadd.xlane.f32.xlu0 %v1011
    %v1014 = vpop.xlane.xlu0 %1013
    %1015 = vadd.xlane.f32.xlu0 %v1012
    %v1016 = vpop.xlane.xlu0 %1015
    %v1017 = vmul.f32 %v946, %v946
    %v1018 = vmul.f32 %v947, %v947
    %v1019 = vmul.f32 %v948, %v948
    %v1020 = vmul.f32 %v949, %v949
    %v1021 = vmul.f32 %v950, %v950
    %v1022 = vmul.f32 %v951, %v951
    %v1023 = vmul.f32 %v952, %v952
    %v1024 = vmul.f32 %v953, %v953
    %v1025 = vmul.f32 %v954, %v954
    %v1026 = vmul.f32 %v955, %v955
    %v1027 = vmul.f32 %v956, %v956
    %v1028 = vmul.f32 %v957, %v957
    %v1029 = vmul.f32 %v958, %v958
    %v1030 = vmul.f32 %v959, %v959
    %v1031 = vmul.f32 %v960, %v960
    %v1032 = vmul.f32 %v961, %v961
    %1033 = vmatprep.subr.mxu0 0.0
    %1034 = vmatpush1.xpose.msra.mxu0 %v1032
    %1035 = vmatprep.subr.mxu0 0.0
    %1036 = vmatpush1.xpose.msra.mxu0 %v1031
    %1037 = vmatprep.subr.mxu0 0.0
    %1038 = vmatpush1.xpose.msra.mxu0 %v1030
    %1039 = vmatprep.subr.mxu0 0.0
    %1040 = vmatpush1.xpose.msra.mxu0 %v1029
    %1041 = vmatprep.subr.mxu0 0.0
    %1042 = vmatpush1.xpose.msra.mxu0 %v1028
    %1043 = vmatprep.subr.mxu0 0.0
    %1044 = vmatpush1.xpose.msra.mxu0 %v1027
    %1045 = vmatprep.subr.mxu0 0.0
    %1046 = vmatpush1.xpose.msra.mxu0 %v1026
    %1047 = vmatprep.subr.mxu0 0.0
    %1048 = vmatpush1.xpose.msra.mxu0 %v1025
    %1049 = vmatprep.subr.mxu0 0.0
    %1050 = vmatpush1.xpose.msra.mxu0 %v1024
    %1051 = vmatprep.subr.mxu0 0.0
    %1052 = vmatpush1.xpose.msra.mxu0 %v1023
    %1053 = vmatprep.subr.mxu0 0.0
    %1054 = vmatpush1.xpose.msra.mxu0 %v1022
    %1055 = vmatprep.subr.mxu0 0.0
    %1056 = vmatpush1.xpose.msra.mxu0 %v1021
    %1057 = vmatprep.subr.mxu0 0.0
    %1058 = vmatpush1.xpose.msra.mxu0 %v1020
    %1059 = vmatprep.subr.mxu0 0.0
    %1060 = vmatpush1.xpose.msra.mxu0 %v1019
    %1061 = vmatprep.subr.mxu0 0.0
    %1062 = vmatpush1.xpose.msra.mxu0 %v1018
    %1063 = vmatprep.subr.mxu0 0.0
    %1064 = vmatpush1.xpose.msra.mxu0 %v1017
    %1065 = vmatprep.subr.mxu0 0.0
    %1066 = vmatpush2.xpose.msra.mxu0 0.0
    %1067 = vmatprep.subr.mxu0 0.0
    %1068 = vmatpush2.xpose.msra.mxu0 0.0
    %1069 = vmatprep.subr.mxu0 0.0
    %1070 = vmatpush2.xpose.msra.mxu0 0.0
    %1071 = vmatprep.subr.mxu0 0.0
    %1072 = vmatpush2.xpose.msra.mxu0 0.0
    %1073 = vmatprep.subr.mxu0 0.0
    %1074 = vmatpush2.xpose.msra.mxu0 0.0
    %1075 = vmatprep.subr.mxu0 0.0
    %1076 = vmatpush2.xpose.msra.mxu0 0.0
    %1077 = vmatprep.subr.mxu0 0.0
    %1078 = vmatpush2.xpose.msra.mxu0 0.0
    %1079 = vmatprep.subr.mxu0 0.0
    %1080 = vmatpush2.xpose.msra.mxu0 0.0
    %1081 = vmatprep.subr.mxu0 0.0
    %1082 = vmatpush2.xpose.msra.mxu0 0.0
    %1083 = vmatprep.subr.mxu0 0.0
    %1084 = vmatpush2.xpose.msra.mxu0 0.0
    %1085 = vmatprep.subr.mxu0 0.0
    %1086 = vmatpush2.xpose.msra.mxu0 0.0
    %1087 = vmatprep.subr.mxu0 0.0
    %1088 = vmatpush2.xpose.msra.mxu0 0.0
    %1089 = vmatprep.subr.mxu0 0.0
    %1090 = vmatpush2.xpose.msra.mxu0 0.0
    %1091 = vmatprep.subr.mxu0 0.0
    %1092 = vmatpush2.xpose.msra.mxu0 0.0
    %1093 = vmatprep.subr.mxu0 0.0
    %1094 = vmatpush2.xpose.msra.mxu0 0.0
    %1095 = vmatprep.subr.mxu0 0.0
    %1096 = vmatpush2.xpose.msra.mxu0 0.0
    %1097 = vmatprep.mubr.f32.mxu0 0.0
    %1098 = vmatmul.mubr.f32.gmra.mxu0 1.0
    %v1099 = vpop.f32.mrf.mxu0
    %v1100 = vadd.f32 0.0, %v1099
    %v1101 = vpop.f32.mrf.mxu0
    %1102 = vdwg.mxu0
    %1103 = vmatprep.subr.mxu0 0.0
    %1104 = vmatpush1.xpose.msra.mxu0 %v961
    %1105 = vmatprep.subr.mxu0 0.0
    %1106 = vmatpush1.xpose.msra.mxu0 %v960
    %1107 = vmatprep.subr.mxu0 0.0
    %1108 = vmatpush1.xpose.msra.mxu0 %v959
    %1109 = vmatprep.subr.mxu0 0.0
    %1110 = vmatpush1.xpose.msra.mxu0 %v958
    %1111 = vmatprep.subr.mxu0 0.0
    %1112 = vmatpush1.xpose.msra.mxu0 %v957
    %1113 = vmatprep.subr.mxu0 0.0
    %1114 = vmatpush1.xpose.msra.mxu0 %v956
    %1115 = vmatprep.subr.mxu0 0.0
    %1116 = vmatpush1.xpose.msra.mxu0 %v955
    %1117 = vmatprep.subr.mxu0 0.0
    %1118 = vmatpush1.xpose.msra.mxu0 %v954
    %1119 = vmatprep.subr.mxu0 0.0
    %1120 = vmatpush1.xpose.msra.mxu0 %v953
    %1121 = vmatprep.subr.mxu0 0.0
    %1122 = vmatpush1.xpose.msra.mxu0 %v952
    %1123 = vmatprep.subr.mxu0 0.0
    %1124 = vmatpush1.xpose.msra.mxu0 %v951
    %1125 = vmatprep.subr.mxu0 0.0
    %1126 = vmatpush1.xpose.msra.mxu0 %v950
    %1127 = vmatprep.subr.mxu0 0.0
    %1128 = vmatpush1.xpose.msra.mxu0 %v949
    %1129 = vmatprep.subr.mxu0 0.0
    %1130 = vmatpush1.xpose.msra.mxu0 %v948
    %1131 = vmatprep.subr.mxu0 0.0
    %1132 = vmatpush1.xpose.msra.mxu0 %v947
    %1133 = vmatprep.subr.mxu0 0.0
    %1134 = vmatpush1.xpose.msra.mxu0 %v946
    %1135 = vmatprep.subr.mxu0 0.0
    %1136 = vmatpush2.xpose.msra.mxu0 0.0
    %1137 = vmatprep.subr.mxu0 0.0
    %1138 = vmatpush2.xpose.msra.mxu0 0.0
    %1139 = vmatprep.subr.mxu0 0.0
    %1140 = vmatpush2.xpose.msra.mxu0 0.0
    %1141 = vmatprep.subr.mxu0 0.0
    %1142 = vmatpush2.xpose.msra.mxu0 0.0
    %1143 = vmatprep.subr.mxu0 0.0
    %1144 = vmatpush2.xpose.msra.mxu0 0.0
    %1145 = vmatprep.subr.mxu0 0.0
    %1146 = vmatpush2.xpose.msra.mxu0 0.0
    %1147 = vmatprep.subr.mxu0 0.0
    %1148 = vmatpush2.xpose.msra.mxu0 0.0
    %1149 = vmatprep.subr.mxu0 0.0
    %1150 = vmatpush2.xpose.msra.mxu0 0.0
    %1151 = vmatprep.subr.mxu0 0.0
    %1152 = vmatpush2.xpose.msra.mxu0 0.0
    %1153 = vmatprep.subr.mxu0 0.0
    %1154 = vmatpush2.xpose.msra.mxu0 0.0
    %1155 = vmatprep.subr.mxu0 0.0
    %1156 = vmatpush2.xpose.msra.mxu0 0.0
    %1157 = vmatprep.subr.mxu0 0.0
    %1158 = vmatpush2.xpose.msra.mxu0 0.0
    %1159 = vmatprep.subr.mxu0 0.0
    %1160 = vmatpush2.xpose.msra.mxu0 0.0
    %1161 = vmatprep.subr.mxu0 0.0
    %1162 = vmatpush2.xpose.msra.mxu0 0.0
    %1163 = vmatprep.subr.mxu0 0.0
    %1164 = vmatpush2.xpose.msra.mxu0 0.0
    %1165 = vmatprep.subr.mxu0 0.0
    %1166 = vmatpush2.xpose.msra.mxu0 0.0
    %1167 = vmatprep.mubr.f32.mxu0 0.0
    %1168 = vmatmul.mubr.f32.gmra.mxu0 %v1005
    %v1169 = vpop.f32.mrf.mxu0
    %v1170 = vadd.f32 0.0, %v1169
    %v1171 = vpop.f32.mrf.mxu0
    %1172 = vmatprep.mubr.f32.mxu0 0.0
    %1173 = vmatmul.mubr.f32.gmra.mxu0 %v1008
    %v1174 = vpop.f32.mrf.mxu0
    %v1175 = vadd.f32 0.0, %v1174
    %v1176 = vpop.f32.mrf.mxu0
    %1177 = vdwg.mxu0
    %v1178 = vlaneseq
    %v1179 = vshrl.u32 %v1178, 7
    %v1180 = vsub.s32 0, %v1179
    %v1181 = vrot.slane %v1100, %v1180
    %v1182 = vadd.f32 %v1014, %v1181
    %v1183 = vadd.f32 %v1016, %v1181
    %v1184 = vmul.f32 %v1170, 2.0
    %v1185 = vmul.f32 %v1175, 2.0
    %v1186 = vsub.f32 %v1182, %v1184
    %v1187 = vsub.f32 %v1183, %v1185
    %v1188 = vmax.f32 %v1186, 0.0
    %v1189 = vmax.f32 %v1187, 0.0
    %v1190 = vsub.f32 0.0, %v1188
    %v1191 = vsub.f32 0.0, %v1189
    %v1192 = vlaneseq
    %v1193 = vand.u32 %v1192, 127
    %vm1194 = vcmp.lt.s32.totalorder %v1193, 4
    %v1195 = vsel %vm1194, %v1190, -1e+30
    %v1196 = vsel %vm1194, %v1191, -1e+30
    %1197 = vmax.xlane.f32.xlu0 %v1195
    %v1198 = vpop.xlane.xlu0 %1197
    %1199 = vmax.xlane.f32.xlu0 %v1196
    %v1200 = vpop.xlane.xlu0 %1199
    %v1201 = vsub.f32 %v1195, %v1198
    %v1202 = vsub.f32 %v1196, %v1200
    %v1203 = vmul.f32 %v1201, 1.442695
    %v1204 = vpow.pop %v1203
    %v1205 = vmul.f32 %v1202, 1.442695
    %v1206 = vpow.pop %v1205
    %1207 = vadd.xlane.f32.xlu0 %v1204
    %v1208 = vpop.xlane.xlu0 %1207
    %1209 = vadd.xlane.f32.xlu0 %v1206
    %v1210 = vpop.xlane.xlu0 %1209
    %v1211 = vlog2.pop %v1208
    %v1212 = vmul.f32 %v1211, 0.6931472
    %v1213 = vlog2.pop %v1210
    %v1214 = vmul.f32 %v1213, 0.6931472
    %v1215 = vadd.f32 %v1198, %v1212
    %v1216 = vadd.f32 %v1200, %v1214
    %v1217 = vsub.f32 %v1195, %v1215
    %v1218 = vsub.f32 %v1196, %v1216
    %1219 = vst [vmem:[#allocation11] sm:$0xff] %v1217
    %1220 = vst [vmem:[#allocation11 + $0x8] sm:$0xff] %v1218
    // Predicated region
    $region46: #{tpu_custom_call.1} parent=1 // pred_check
      _
    $region47: #{tpu_custom_call.1} parent=1 // pred_check_branch
      %1222 = sbr.rel (0) target = $region49
    $region48: #{tpu_custom_call.1} parent=1 // pred_region
      %s1224 = ssub.s32 256, 256
      %1225 = vsyncadd [#allocation4], %s1224
      %s1226 = sshll.u32 [#allocation11], 4
      %s1227 = int_to_ptr.vmem [resolvable:$true] %s1226
      %1232 = dma.vmem_to_hbm [thread:$0]  %s1227, 256, %s6, [#allocation4], 128, 128, 8
    $region49: #{tpu_custom_call.1} parent=1 // pred_fallthru
      _
    // Predicated region
    $region50: #{tpu_custom_call.1} parent=1 // pred_check
      _
    $region51: #{tpu_custom_call.1} parent=1 // pred_check_branch
      %1234 = sbr.rel (0) target = $region53
    $region52: #{tpu_custom_call.1} parent=1 // pred_region
      %1235 = dma.done [#allocation4], 256
    $region53: #{tpu_custom_call.1} parent=1 // pred_fallthru
      _
    %1236 = vsyncpa [#allocation3], 1
    %1237 = vsyncpa [#allocation6], 1
    %1238 = vsyncpa [#allocation9], 1
    %1239 = vsyncpa [#allocation4], 1

</llo_original>
